<compile_context>
chip_gen: v7x
topology: tpu7x:2x2x1
jax: 0.10.0
libtpu: 0.0.40
codegen_flags: <defaults>
</compile_context>

<pallas_src>
import math

import jax
import jax.numpy as jnp
import numpy as np
from jax.experimental import pallas as pl
from jax.experimental.pallas import tpu as pltpu


_TARGET_BLOCK_BYTES = 4 * 1024 * 1024     # ~4 MiB x tiles: >=86% of HBM roofline
_VMEM_LIMIT_BYTES = 32 * 1024 * 1024      # raise v5e's 16 MiB scoped default; safe on v6e/v7x
_SPLIT_THRESHOLD_BYTES = 512 * 1024       # above this, force >=2 blocks (v7x has 2 TCs)


def _align_down(x, m):
    return (x // m) * m


def _align_up(x, m):
    return ((x + m - 1) // m) * m


def _lcm(a, b):
    return a * b // math.gcd(a, b)


def _prelu_kernel(x_ref, w_ref, o_ref):
    # x_ref/o_ref: VMEM (TR, TL); w_ref: VMEM (TR, 1) per-row slope in x.dtype.
    x = x_ref[...]
    w = w_ref[...]                        # (TR, 1), broadcasts over lanes
    o_ref[...] = jnp.where(x > 0, x, w * x)


def prelu_pallas(x, weight):
    """PReLU(x) = x if x > 0 else weight[c] * x, weight broadcast over dim 1."""
    orig_shape = x.shape
    assert x.ndim >= 2, "expected input with a channel dimension at axis 1"
    N, C = int(x.shape[0]), int(x.shape[1])
    L = 1
    for d in x.shape[2:]:
        L *= int(d)
    R = N * C
    itemsize = jnp.dtype(x.dtype).itemsize

    # Row-tile granularity: multiple of 32 (packed-dtype vreg tiles) and of C
    # (so a single resident (TR, 1) slope column is valid for every row block).
    step = _lcm(32, C)
    resident = step * 128 * itemsize <= _TARGET_BLOCK_BYTES
    if not resident:
        step = 32                         # stream per-row slopes instead

    # Lane handling: keep output stores lane-dense (multiples of 128).
    L_pad = L if L % 128 == 0 else _align_up(L, 128)
    x2 = x.reshape(R, L)
    if L_pad != L:
        # TODO(synk): for very large misaligned H*W the pad/slice adds an extra
        # HBM pass; a masked full-width block may be cheaper in that regime.
        x2 = jnp.pad(x2, ((0, 0), (0, L_pad - L)))

    # Tile sizes: lane chunk first (bounds one step-row strip to ~TARGET), then
    # fill ~TARGET bytes of x per block with rows.
    TL = min(L_pad, max(128, _align_down(_TARGET_BLOCK_BYTES // (step * itemsize), 128)))
    TR = max(step, _align_down(_TARGET_BLOCK_BYTES // (TL * itemsize), step))
    total_bytes = R * L_pad * itemsize
    if total_bytes >= _SPLIT_THRESHOLD_BYTES and pl.cdiv(L_pad, TL) == 1:
        # Guarantee >=2 grid blocks so both v7x TensorCores get work.
        cap = _align_up(pl.cdiv(R, 2), step)
        if cap < R:
            TR = min(TR, cap)
    if TR >= R:
        TR = R                            # whole row range (R = N*C, multiple of C)

    # Per-row slope column, cast once to the input dtype (native-dtype compute).
    w_chan = jnp.broadcast_to(weight.reshape(-1), (C,)).astype(x.dtype)
    if resident:
        # One block's worth of the repeating pattern; constant index_map below
        # => fetched once, stays resident (no per-step strided slope DMA).
        w_arr = jnp.tile(w_chan, TR // C).reshape(TR, 1)
        w_spec = pl.BlockSpec((TR, 1), lambda i, j: (0, 0))
    else:
        # C too large for a resident pattern block: stream per-row slopes.
        w_arr = jnp.tile(w_chan, N).reshape(R, 1)
        w_spec = pl.BlockSpec((TR, 1), lambda i, j: (i, 0))

    grid = (pl.cdiv(R, TR), pl.cdiv(L_pad, TL))

    out2 = pl.pallas_call(
        _prelu_kernel,
        out_shape=jax.ShapeDtypeStruct((R, L_pad), x.dtype),
        grid=grid,
        in_specs=[
            pl.BlockSpec((TR, TL), lambda i, j: (i, j)),
            w_spec,
        ],
        out_specs=pl.BlockSpec((TR, TL), lambda i, j: (i, j)),
        compiler_params=pltpu.CompilerParams(
            dimension_semantics=("parallel", "parallel"),
            vmem_limit_bytes=_VMEM_LIMIT_BYTES,
        ),
        cost_estimate=pl.CostEstimate(
            flops=2 * R * L_pad,
            bytes_accessed=2 * R * L_pad * itemsize + int(w_arr.shape[0]) * itemsize,
            transcendentals=0,
        ),
    )(x2, w_arr)

    if L_pad != L:
        out2 = out2[:, :L]
    return out2.reshape(orig_shape)


class CustomPReLU:
    """JAX/Pallas port of the PyTorch CustomPReLU module (forward only)."""

    def __init__(self, num_parameters=1, init=0.25):
        self.num_parameters = num_parameters
        # same as torch.full((num_parameters,), init)
        self.weight = jnp.full((num_parameters,), init, dtype=jnp.float32)
        # jit so the tiny slope-column prep fuses into one executable instead of
        # dispatching separate micro-ops every call.
        self._forward = jax.jit(prelu_pallas)

    def __call__(self, x):
        return self._forward(x, self.weight)


if __name__ == "__main__":
    key = jax.random.PRNGKey(0)
    k1, k2, k3 = jax.random.split(key, 3)

    # --- small 4D case matching typical module use (N, C, H, W) -------------
    N, C, H, W = 2, 4, 16, 16
    x = jax.random.normal(k1, (N, C, H, W), dtype=jnp.float32)

    mod_perchan = CustomPReLU(num_parameters=C, init=0.25)
    out_pc = jax.block_until_ready(mod_perchan(x))
    ref_pc = jnp.where(x > 0, x, mod_perchan.weight[None, :, None, None] * x)
    np.testing.assert_allclose(np.asarray(out_pc), np.asarray(ref_pc),
                               rtol=1e-6, atol=1e-6)

    mod_shared = CustomPReLU(num_parameters=1, init=0.25)   # PyTorch default
    out_sh = jax.block_until_ready(mod_shared(x))
    ref_sh = jnp.where(x > 0, x, mod_shared.weight[0] * x)
    np.testing.assert_allclose(np.asarray(out_sh), np.asarray(ref_sh),
                               rtol=1e-6, atol=1e-6)

    # --- larger case: exercises the multi-block grid + resident slope column ---
    N2, C2, H2, W2 = 8, 16, 32, 32
    x_big = jax.random.normal(k2, (N2, C2, H2, W2), dtype=jnp.float32)
    mod2 = CustomPReLU(num_parameters=C2, init=0.1)
    mod2.weight = jnp.linspace(-0.5, 0.5, C2, dtype=jnp.float32)  # distinct slopes
    out_big = jax.block_until_ready(mod2(x_big))
    ref_big = jnp.where(x_big > 0, x_big, mod2.weight[None, :, None, None] * x_big)
    np.testing.assert_allclose(np.asarray(out_big), np.asarray(ref_big),
                               rtol=1e-6, atol=1e-6)

    # --- misaligned spatial dim (H*W % 128 != 0): exercises lane padding -------
    x_mis = jax.random.normal(k3, (2, 4, 14, 14), dtype=jnp.float32)
    mod3 = CustomPReLU(num_parameters=4, init=0.25)
    out_mis = jax.block_until_ready(mod3(x_mis))
    ref_mis = jnp.where(x_mis > 0, x_mis, mod3.weight[None, :, None, None] * x_mis)
    np.testing.assert_allclose(np.asarray(out_mis), np.asarray(ref_mis),
                               rtol=1e-6, atol=1e-6)

    print("KERNEL_OK")
</pallas_src>

<mosaic_0001>
module attributes {stable_mosaic.version = 11 : i64} {
  func.func @_prelu_kernel(%arg0: i32, %arg1: i32, %arg2: memref<8x256xf32, #tpu.memory_space<vmem>>, %arg3: memref<8x1xf32, #tpu.memory_space<vmem>>, %arg4: memref<8x256xf32, #tpu.memory_space<vmem>>) attributes {dimension_semantics = [#tpu.dimension_semantics<parallel>, #tpu.dimension_semantics<parallel>], iteration_bounds = array<i64: 1, 1>, scalar_prefetch = 0 : i64, scratch_operands = 0 : i64, tpu.core_type = #tpu.core_type<tc>, window_params = [{transform_indices = @transform_0, window_bounds = array<i64: 8, 256>}, {pipeline_mode = #tpu.pipeline_mode<synchronous>, transform_indices = @transform_1, window_bounds = array<i64: 8, 1>}, {transform_indices = @transform_2, window_bounds = array<i64: 8, 256>}]} {
    %c0 = arith.constant 0 : index
    %c0_0 = arith.constant 0 : index
    %0 = vector.load %arg2[%c0, %c0_0] : memref<8x256xf32, #tpu.memory_space<vmem>>, vector<8x256xf32>
    %c0_1 = arith.constant 0 : index
    %c0_2 = arith.constant 0 : index
    %1 = vector.load %arg3[%c0_1, %c0_2] : memref<8x1xf32, #tpu.memory_space<vmem>>, vector<8x1xf32>
    %cst = arith.constant 0.000000e+00 : f32
    %2 = vector.broadcast %cst : f32 to vector<8x256xf32>
    %3 = arith.cmpf ogt, %0, %2 : vector<8x256xf32>
    %4 = vector.broadcast %1 : vector<8x1xf32> to vector<8x256xf32>
    %5 = arith.mulf %4, %0 : vector<8x256xf32>
    %6 = arith.select %3, %0, %5 : vector<8x256xi1>, vector<8x256xf32>
    %c0_3 = arith.constant 0 : index
    %c0_4 = arith.constant 0 : index
    %7 = vector.load %arg4[%c0_3, %c0_4] : memref<8x256xf32, #tpu.memory_space<vmem>>, vector<8x256xf32>
    tpu.vector_store %arg4[%c0_3, %c0_4], %6 {strides = array<i32>} : memref<8x256xf32, #tpu.memory_space<vmem>>, vector<8x256xf32>,
    return
  }
  func.func @transform_0(%arg0: i32, %arg1: i32) -> (i32, i32) {
    %c0_i32 = arith.constant 0 : i32
    return %arg0, %arg1 : i32, i32
  }
  func.func @transform_1(%arg0: i32, %arg1: i32) -> (i32, i32) {
    %c0_i32 = arith.constant 0 : i32
    %c0_i32_0 = arith.constant 0 : i32
    %c0_i32_1 = arith.constant 0 : i32
    return %c0_i32, %c0_i32_0 : i32, i32
  }
  func.func @transform_2(%arg0: i32, %arg1: i32) -> (i32, i32) {
    %c0_i32 = arith.constant 0 : i32
    return %arg0, %arg1 : i32, i32
  }
}

</mosaic_0001>

<llo_original>
// kernel: tile.0
$region0: #{tile.0}
  %s0 = inlined_call_operand.vmem [shape: f32[2,4], index: 0, kind: input, shape index: {}]
  %s1 = inlined_call_operand.vmem [shape: f32[8,1], index: 1, kind: output, shape index: {}]
  $region1: #{tile.0} parent=0
    #allocation0 [shape = 'u8[4096]{0}', space=vmem, size = 0x1000, scoped, tag = 'scoped mem for input reshape']
    %s3 = sshllo.u32 0, 2
    %v4 = vld [vmem:[%s0] sm:%s3]
    %5 = vst [vmem:[#allocation0] sm:%s3] %v4
    %v6 = vld [vmem:[#allocation0] sm:$0x3]
    %vm7 = vcmask 7168
    %8 = vst.msk [vmem:[%s1] ss:$4 sm:$0x3] %vm7, %v6
    %v9 = vld [vmem:[#allocation0] sm:$0x3]
    %10 = vrot.lane.b32.xlu0 %v9, 127
    %v11 = vpop.permute.xlu0 %10
    %vm12 = vcmask 7168
    %s13 = scalar_lea.vmem %s1, 1
    %14 = vst.msk [vmem:[%s13] ss:$4 sm:$0x3] %vm12, %v11
    %v15 = vld [vmem:[#allocation0] sm:$0x3]
    %16 = vrot.lane.b32.xlu0 %v15, 126
    %v17 = vpop.permute.xlu0 %16
    %vm18 = vcmask 7168
    %s19 = scalar_lea.vmem %s1, 2
    %20 = vst.msk [vmem:[%s19] ss:$4 sm:$0x3] %vm18, %v17
    %v21 = vld [vmem:[#allocation0] sm:$0x3]
    %22 = vrot.lane.b32.xlu0 %v21, 125
    %v23 = vpop.permute.xlu0 %22
    %vm24 = vcmask 7168
    %s25 = scalar_lea.vmem %s1, 3
    %26 = vst.msk [vmem:[%s25] ss:$4 sm:$0x3] %vm24, %v23

// kernel: tile.8
$region0: #{tile.8}
  #allocation0 [shape = 's32[1]{0}', space=sflag, size = 0x4, scoped, tag = 'scoped memory for tile.8']
  %s0 = inlined_call_operand.vmem [shape: f32[4], index: 0, kind: input, shape index: {}]
  %s1 = inlined_call_operand.vmem [shape: f32[2,4], index: 1, kind: output, shape index: {}]
  // Predicated region
  $region2: #{tile.8} parent=0 // pred_check
    _
  $region3: #{tile.8} parent=0 // pred_check_branch
    %3 = sbr.rel (0) target = $region5
  $region4: #{tile.8} parent=0 // pred_region
    _
  $region5: #{tile.8} parent=0 // pred_fallthru
    _
  %v4 = vld [vmem:[%s0] ss:$0 sm:$0xff]
  %5 = vst [vmem:[%s1] sm:$0x3] %v4

// kernel: prelu_pallas.1
$region0: #{prelu_pallas.1}
  #allocation0 [shape = 'u32[]', space=smem, size = 0x4, offset = 0x4, fixed_abs, tag = 'smem constant byte address 0x4 - core index']
  #allocation1 [shape = 'u32[144,128]{1,0:T(1,128)}', space=vmem, size = 0x12000, scoped, tag = 'internal scratch']
  %s0 = inlined_call_operand.vmem [shape: f32[8,256], index: 0, kind: input, shape index: {}]
  %s1 = inlined_call_operand.vmem [shape: f32[8,1], index: 1, kind: input, shape index: {}]
  %s2 = inlined_call_operand.vmem [shape: f32[8,256], index: 2, kind: output, shape index: {}]
  %s3 = sld [smem:[#allocation0]]
  $region18: #{prelu_pallas.1} parent=0
    _
  %s5 = ssub.s32 1, %s3
  %s6 = scalar_select 0, %s5, %s3
  // Predicated region
  $region2: #{prelu_pallas.1} parent=0 // pred_check
    _
  $region3: #{prelu_pallas.1} parent=0 // pred_check_branch
    %8 = sbr.rel (0) target = $region5
  $region4: #{prelu_pallas.1} parent=0 // pred_region
    _
  $region5: #{prelu_pallas.1} parent=0 // pred_fallthru
    _
  // Predicated region
  $region6: #{prelu_pallas.1} parent=0 // pred_check
    _
  $region7: #{prelu_pallas.1} parent=0 // pred_check_branch
    %10 = sbr.rel (0) target = $region9
  $region8: #{prelu_pallas.1} parent=0 // pred_region
    _
  $region9: #{prelu_pallas.1} parent=0 // pred_fallthru
    _
  %v11 = vld [vmem:[%s0] sm:$0xff]
  %v12 = vld [vmem:[%s0 + $0x8] sm:$0xff]
  %v13 = vld [vmem:[%s1] sm:$0xff]
  %vm14 = vcmp.gt.f32.partialorder %v11, 0.0
  %vm15 = vcmp.gt.f32.partialorder %v12, 0.0
  %17 = vset.pattern.permute.xlu0 0
  %18 = vperm.xlu0 %17, %v13
  %v19 = vpop.permute.xlu0 %18
  %v21 = vmul.f32 %v19, %v11
  %v22 = vmul.f32 %v19, %v12
  %v23 = vsel %vm14, %v11, %v21
  %v24 = vsel %vm15, %v12, %v22
  %25 = vst [vmem:[%s2] sm:$0xff] %v23
  %26 = vst [vmem:[%s2 + $0x8] sm:$0xff] %v24
  // Predicated region
  $region10: #{prelu_pallas.1} parent=0 // pred_check
    _
  $region11: #{prelu_pallas.1} parent=0 // pred_check_branch
    %28 = sbr.rel (0) target = $region13
  $region12: #{prelu_pallas.1} parent=0 // pred_region
    _
  $region13: #{prelu_pallas.1} parent=0 // pred_fallthru
    _
  // Predicated region
  $region14: #{prelu_pallas.1} parent=0 // pred_check
    _
  $region15: #{prelu_pallas.1} parent=0 // pred_check_branch
    %30 = sbr.rel (0) target = $region17
  $region16: #{prelu_pallas.1} parent=0 // pred_region
    _
  $region17: #{prelu_pallas.1} parent=0 // pred_fallthru
    _

</llo_original>
